<compile_context>
chip_gen: v6e
topology: v6e:2x2x1
jax: 0.10.0
libtpu: 0.0.40
codegen_flags: <defaults>
</compile_context>

<pallas_src>
import jax
import jax.numpy as jnp
from jax.experimental import pallas as pl
from jax.experimental.pallas import tpu as pltpu

EPSILON = 1e-5
_LANE = 128
_SUBLANE = 8


def _round_up(x, m):
    return ((x + m - 1) // m) * m


def _vmem_capacity_bytes():
    """Physical VMEM of the attached TPU; conservative 64 MiB if unknown."""
    try:
        info = pltpu.get_tpu_info()
        cap = getattr(info, "vmem_capacity_bytes", None)
        if cap:
            return int(cap)
    except Exception:
        pass
    return 64 * 1024 * 1024  # v7x-safe default; v5e/v6e simply use smaller tiles.


# ---------------------------------------------------------------------------
# Single-pass kernel: one grid step owns NB whole samples (full C x HW each).
# ---------------------------------------------------------------------------
def _gct_single_pass_kernel(x_ref, p_ref, o_ref):
    """x_ref/o_ref: (NB, C, HW); p_ref: (3, C, 1) = [alpha, gamma, beta] (f32)."""
    alpha = p_ref[0]                                                   # (C, 1)
    gamma = p_ref[1]
    beta = p_ref[2]
    # f32 accumulation of the per-channel sum of squares; the cast lives inside
    # the reduction expression so no full f32 copy of a bf16 tile is kept.
    ss = jnp.sum(jnp.square(x_ref[...].astype(jnp.float32)),
                 axis=-1, keepdims=True)                               # (NB, C, 1)
    embedding = jnp.sqrt(ss + EPSILON) * alpha                         # (NB, C, 1)
    mean_c = jnp.mean(jnp.square(embedding), axis=1, keepdims=True)    # (NB, 1, 1)
    norm = gamma * jax.lax.rsqrt(mean_c + EPSILON)                     # (NB, C, 1)
    gate = 1.0 + jnp.tanh(embedding * norm + beta)                     # (NB, C, 1)
    # Gating multiply stays in the I/O dtype (bf16 in -> bf16 math -> bf16 out).
    o_ref[...] = x_ref[...] * gate.astype(o_ref.dtype)


# ---------------------------------------------------------------------------
# Two-pass fallback (large feature maps): pass 1 builds the (N, C, 1) gate from
# an HW-tiled reduction, pass 2 streams x again and applies the gate.
# ---------------------------------------------------------------------------
def _make_gate_kernel(hw, thw, needs_mask):
    def kernel(x_ref, p_ref, gate_ref, ss_ref):
        # x_ref: (1, C, thw); p_ref: (3, C, 1); gate_ref/ss_ref: (1, C, 1) f32.
        j = pl.program_id(1)

        @pl.when(j == 0)
        def _():
            ss_ref[...] = jnp.zeros_like(ss_ref)

        xf = x_ref[...].astype(jnp.float32)
        if needs_mask:
            # Zero out columns past HW in the (possibly partial) last HW block.
            col = jax.lax.broadcasted_iota(jnp.int32, x_ref.shape, 2) + j * thw
            xf = jnp.where(col < hw, xf, 0.0)
        ss_ref[...] += jnp.sum(xf * xf, axis=-1, keepdims=True)

        @pl.when(j == pl.num_programs(1) - 1)
        def _():
            alpha = p_ref[0]
            gamma = p_ref[1]
            beta = p_ref[2]
            embedding = jnp.sqrt(ss_ref[...] + EPSILON) * alpha
            mean_c = jnp.mean(jnp.square(embedding), axis=1, keepdims=True)
            norm = gamma * jax.lax.rsqrt(mean_c + EPSILON)
            gate_ref[...] = 1.0 + jnp.tanh(embedding * norm + beta)

    return kernel


def _gct_apply_kernel(x_ref, g_ref, o_ref):
    # x_ref/o_ref: (1, C, thw); g_ref: (1, C, 1) f32 gate, broadcast over HW.
    o_ref[...] = x_ref[...] * g_ref[...].astype(o_ref.dtype)


# ---------------------------------------------------------------------------
# Wrapper
# ---------------------------------------------------------------------------
def gct_spatial(x, alpha, gamma, beta, spatial_embedding=None,
                *, force_two_pass=False, hw_tile=None):
    """x: (N, C, H, W); alpha/gamma/beta: (1, C, 1, 1). Returns (N, C, H, W)."""
    del spatial_embedding            # unused by the reference forward pass
    N, C, H, W = x.shape
    HW = H * W
    x_flat = x.reshape(N, C, HW)     # metadata-only for a contiguous array

    # Fuse the three per-channel parameters into one grid-invariant f32 tile.
    params = jnp.stack(
        [alpha.reshape(C, 1), gamma.reshape(C, 1), beta.reshape(C, 1)],
        axis=0).astype(jnp.float32)                       # (3, C, 1)

    itemsize = jnp.dtype(x.dtype).itemsize
    sub = _SUBLANE * max(1, 4 // itemsize)                # sublane packing
    Cp = _round_up(C, sub)
    HWp = _round_up(HW, _LANE)
    samp_io = Cp * HWp * itemsize                         # one sample, I/O dtype
    samp_f32 = _round_up(C, _SUBLANE) * HWp * 4           # one sample, f32 temp
    # 2x double-buffered input + 2x output + one f32 temp as safety margin.
    per_sample_vmem = 4 * samp_io + samp_f32

    cap = _vmem_capacity_bytes()
    vmem_limit_cap = int(0.9 * cap)                       # never exceed physical
    tile_budget = int(0.7 * cap)                          # budget for live tiles
    target_tile = min(max(cap // 12, 4 << 20), 16 << 20)  # ~5 MiB v7x, ~10 MiB v6e

    two_pass = force_two_pass or per_sample_vmem > tile_budget

    if not two_pass:
        # ---- single pass: batch-blocked streaming kernel --------------------
        nb = max(target_tile // samp_io, 1)
        nb = min(nb, max(tile_budget // per_sample_vmem, 1), N)
        nb = min(nb, pl.cdiv(N, min(N, 4)))   # >= min(N,4) steps for megacore
        nb = max(int(nb), 1)
        num_blocks = pl.cdiv(N, nb)

        vmem_limit = int(min(vmem_limit_cap,
                             max(16 << 20, nb * per_sample_vmem + (4 << 20))))

        out = pl.pallas_call(
            _gct_single_pass_kernel,
            out_shape=jax.ShapeDtypeStruct((N, C, HW), x.dtype),
            grid_spec=pltpu.PrefetchScalarGridSpec(
                num_scalar_prefetch=0,
                grid=(num_blocks,),
                in_specs=[
                    pl.BlockSpec((nb, C, HW), lambda i: (i, 0, 0)),
                    pl.BlockSpec((3, C, 1), lambda i: (0, 0, 0)),
                ],
                out_specs=pl.BlockSpec((nb, C, HW), lambda i: (i, 0, 0)),
            ),
            compiler_params=pltpu.CompilerParams(
                dimension_semantics=("parallel",),
                vmem_limit_bytes=vmem_limit),
        )(x_flat, params)
        return out.reshape(N, C, H, W)

    # ---- two-pass fallback: HW-split reduction + gated apply -----------------
    if hw_tile is not None:
        thw = int(hw_tile)                                 # must be k*128 or >= HW
    else:
        thw = max((target_tile // (Cp * itemsize)) // _LANE * _LANE, _LANE)
    if thw >= HW:
        thw = HW
    hw_blocks = pl.cdiv(HW, thw)
    needs_mask = (HW % thw) != 0
    # TODO(synk): extremely large C (C*128*itemsize > VMEM budget) would also
    # need a channel split with a second-level reduction for the mean over C.

    thw_p = _round_up(thw, _LANE)
    tile_io = Cp * thw_p * itemsize
    tile_f32 = _round_up(C, _SUBLANE) * thw_p * 4

    gate_kernel = _make_gate_kernel(HW, thw, needs_mask)
    gate = pl.pallas_call(
        gate_kernel,
        out_shape=jax.ShapeDtypeStruct((N, C, 1), jnp.float32),
        grid_spec=pltpu.PrefetchScalarGridSpec(
            num_scalar_prefetch=0,
            grid=(N, hw_blocks),
            in_specs=[
                pl.BlockSpec((1, C, thw), lambda i, j: (i, 0, j)),
                pl.BlockSpec((3, C, 1), lambda i, j: (0, 0, 0)),
            ],
            out_specs=pl.BlockSpec((1, C, 1), lambda i, j: (i, 0, 0)),
            scratch_shapes=[pltpu.VMEM((1, C, 1), jnp.float32)],
        ),
        compiler_params=pltpu.CompilerParams(
            dimension_semantics=("parallel", "arbitrary"),
            vmem_limit_bytes=int(min(vmem_limit_cap,
                                     max(16 << 20,
                                         2 * tile_io + 2 * tile_f32 + (4 << 20))))),
    )(x_flat, params)

    out = pl.pallas_call(
        _gct_apply_kernel,
        out_shape=jax.ShapeDtypeStruct((N, C, HW), x.dtype),
        grid_spec=pltpu.PrefetchScalarGridSpec(
            num_scalar_prefetch=0,
            grid=(N, hw_blocks),
            in_specs=[
                pl.BlockSpec((1, C, thw), lambda i, j: (i, 0, j)),
                pl.BlockSpec((1, C, 1), lambda i, j: (i, 0, 0)),
            ],
            out_specs=pl.BlockSpec((1, C, thw), lambda i, j: (i, 0, j)),
        ),
        compiler_params=pltpu.CompilerParams(
            dimension_semantics=("parallel", "parallel"),
            vmem_limit_bytes=int(min(vmem_limit_cap,
                                     max(16 << 20, 4 * tile_io + (4 << 20))))),
    )(x_flat, gate)
    return out.reshape(N, C, H, W)


def gct_spatial_ref(x, alpha, gamma, beta):
    """Pure-JAX reference mirroring the PyTorch forward (mode='l2')."""
    x = x.astype(jnp.float32)
    embedding = jnp.sqrt(jnp.sum(x * x, axis=(2, 3), keepdims=True) + EPSILON) * alpha
    norm = gamma / jnp.sqrt(
        jnp.mean(embedding * embedding, axis=1, keepdims=True) + EPSILON)
    gate = 1.0 + jnp.tanh(embedding * norm + beta)
    return x * gate


if __name__ == "__main__":
    key = jax.random.PRNGKey(0)
    k_x, k_a, k_g, k_b, k_s, k_x2, k_x3, k_x4 = jax.random.split(key, 8)

    # --- case 1: lane-aligned spatial (HW multiple of 128) --------------------
    N, C, H, W = 2, 4, 16, 16
    x = jax.random.normal(k_x, (N, C, H, W), dtype=jnp.float32)
    alpha = 1.0 + 0.1 * jax.random.normal(k_a, (1, C, 1, 1), dtype=jnp.float32)
    gamma = 0.5 * jax.random.normal(k_g, (1, C, 1, 1), dtype=jnp.float32)
    beta = 0.1 * jax.random.normal(k_b, (1, C, 1, 1), dtype=jnp.float32)
    spatial_embedding = jax.random.normal(k_s, (N, C, H, W), dtype=jnp.float32)

    out = jax.block_until_ready(gct_spatial(x, alpha, gamma, beta, spatial_embedding))
    ref = gct_spatial_ref(x, alpha, gamma, beta)
    assert out.shape == (N, C, H, W)
    assert jnp.allclose(out, ref, atol=1e-4, rtol=1e-4), "f32 mismatch vs reference"

    # --- case 2: HW not a multiple of 128, N not a multiple of the batch block
    #             (exercises masked lane stores + partial batch blocks) --------
    N2, C2, H2, W2 = 5, 4, 7, 7
    x2 = jax.random.normal(k_x2, (N2, C2, H2, W2), dtype=jnp.float32)
    a2 = jnp.ones((1, C2, 1, 1), jnp.float32)
    g2 = 0.3 * jnp.ones((1, C2, 1, 1), jnp.float32)
    b2 = -0.2 * jnp.ones((1, C2, 1, 1), jnp.float32)
    out2 = jax.block_until_ready(gct_spatial(x2, a2, g2, b2))
    ref2 = gct_spatial_ref(x2, a2, g2, b2)
    assert jnp.allclose(out2, ref2, atol=1e-4, rtol=1e-4), "partial-block mismatch"

    # --- case 3: bf16 I/O (f32 accumulation inside the kernel) ----------------
    x_bf = x.astype(jnp.bfloat16)
    out_bf = jax.block_until_ready(gct_spatial(x_bf, alpha, gamma, beta))
    ref_bf = gct_spatial_ref(x_bf.astype(jnp.float32), alpha, gamma, beta)
    assert out_bf.dtype == jnp.bfloat16
    assert jnp.allclose(out_bf.astype(jnp.float32), ref_bf, atol=0.1, rtol=0.1), \
        "bf16 mismatch vs reference"

    # --- case 4: force the two-pass HW-split fallback (HW=144 > tile of 128,
    #             not a multiple, so the masked partial HW block is exercised) -
    N4, C4, H4, W4 = 2, 8, 12, 12
    x4 = jax.random.normal(k_x4, (N4, C4, H4, W4), dtype=jnp.float32)
    a4 = 1.0 + 0.1 * jax.random.normal(k_x3, (1, C4, 1, 1), dtype=jnp.float32)
    g4 = 0.4 * jnp.ones((1, C4, 1, 1), jnp.float32)
    b4 = 0.05 * jnp.ones((1, C4, 1, 1), jnp.float32)
    out4 = jax.block_until_ready(
        gct_spatial(x4, a4, g4, b4, force_two_pass=True, hw_tile=128))
    ref4 = gct_spatial_ref(x4, a4, g4, b4)
    assert jnp.allclose(out4, ref4, atol=1e-4, rtol=1e-4), "two-pass mismatch"

    print("KERNEL_OK")
</pallas_src>

<mosaic_0001>
module attributes {stable_mosaic.version = 11 : i64} {
  func.func @_gct_single_pass_kernel(%arg0: i32, %arg1: memref<1x4x256xf32, #tpu.memory_space<vmem>>, %arg2: memref<3x4x1xf32, #tpu.memory_space<vmem>>, %arg3: memref<1x4x256xf32, #tpu.memory_space<vmem>>) attributes {dimension_semantics = [#tpu.dimension_semantics<parallel>], iteration_bounds = array<i64: 2>, scalar_prefetch = 0 : i64, scratch_operands = 0 : i64, tpu.core_type = #tpu.core_type<tc>, window_params = [{transform_indices = @transform_0, window_bounds = array<i64: 1, 4, 256>}, {pipeline_mode = #tpu.pipeline_mode<synchronous>, transform_indices = @transform_1, window_bounds = array<i64: 3, 4, 1>}, {transform_indices = @transform_2, window_bounds = array<i64: 1, 4, 256>}]} {
    %c0 = arith.constant 0 : index
    %c0_0 = arith.constant 0 : index
    %c0_1 = arith.constant 0 : index
    %0 = vector.load %arg2[%c0, %c0_0, %c0_1] : memref<3x4x1xf32, #tpu.memory_space<vmem>>, vector<1x4x1xf32>
    %1 = vector.shape_cast %0 : vector<1x4x1xf32> to vector<4x1xf32>
    %c1 = arith.constant 1 : index
    %c0_2 = arith.constant 0 : index
    %c0_3 = arith.constant 0 : index
    %2 = vector.load %arg2[%c1, %c0_2, %c0_3] : memref<3x4x1xf32, #tpu.memory_space<vmem>>, vector<1x4x1xf32>
    %3 = vector.shape_cast %2 : vector<1x4x1xf32> to vector<4x1xf32>
    %c2 = arith.constant 2 : index
    %c0_4 = arith.constant 0 : index
    %c0_5 = arith.constant 0 : index
    %4 = vector.load %arg2[%c2, %c0_4, %c0_5] : memref<3x4x1xf32, #tpu.memory_space<vmem>>, vector<1x4x1xf32>
    %5 = vector.shape_cast %4 : vector<1x4x1xf32> to vector<4x1xf32>
    %c0_6 = arith.constant 0 : index
    %c0_7 = arith.constant 0 : index
    %c0_8 = arith.constant 0 : index
    %6 = vector.load %arg1[%c0_6, %c0_7, %c0_8] : memref<1x4x256xf32, #tpu.memory_space<vmem>>, vector<1x4x256xf32>
    %7 = arith.mulf %6, %6 : vector<1x4x256xf32>
    %cst = arith.constant dense<0.000000e+00> : vector<1x4xf32>
    %8 = vector.multi_reduction <add>, %7, %cst [2] : vector<1x4x256xf32> to vector<1x4xf32>
    %9 = vector.shape_cast %8 : vector<1x4xf32> to vector<1x4x1xf32>
    %cst_9 = arith.constant 9.99999974E-6 : f32
    %10 = vector.broadcast %cst_9 : f32 to vector<1x4x1xf32>
    %11 = arith.addf %9, %10 : vector<1x4x1xf32>
    %12 = math.sqrt %11 : vector<1x4x1xf32>
    %13 = vector.shape_cast %1 : vector<4x1xf32> to vector<1x4x1xf32>
    %14 = arith.mulf %12, %13 : vector<1x4x1xf32>
    %15 = arith.mulf %14, %14 : vector<1x4x1xf32>
    %cst_10 = arith.constant dense<0.000000e+00> : vector<1x1xf32>
    %16 = vector.multi_reduction <add>, %15, %cst_10 [1] : vector<1x4x1xf32> to vector<1x1xf32>
    %17 = vector.shape_cast %16 : vector<1x1xf32> to vector<1x1x1xf32>
    %cst_11 = arith.constant 4.000000e+00 : f32
    %18 = vector.broadcast %cst_11 : f32 to vector<1x1x1xf32>
    %19 = arith.divf %17, %18 : vector<1x1x1xf32>
    %cst_12 = arith.constant 9.99999974E-6 : f32
    %20 = vector.broadcast %cst_12 : f32 to vector<1x1x1xf32>
    %21 = arith.addf %19, %20 : vector<1x1x1xf32>
    %22 = math.rsqrt %21 : vector<1x1x1xf32>
    %23 = vector.shape_cast %3 : vector<4x1xf32> to vector<1x4x1xf32>
    %24 = vector.broadcast %22 : vector<1x1x1xf32> to vector<1x4x1xf32>
    %25 = arith.mulf %23, %24 : vector<1x4x1xf32>
    %26 = arith.mulf %14, %25 : vector<1x4x1xf32>
    %27 = vector.shape_cast %5 : vector<4x1xf32> to vector<1x4x1xf32>
    %28 = arith.addf %26, %27 : vector<1x4x1xf32>
    %29 = math.tanh %28 : vector<1x4x1xf32>
    %cst_13 = arith.constant 1.000000e+00 : f32
    %30 = vector.broadcast %cst_13 : f32 to vector<1x4x1xf32>
    %31 = arith.addf %30, %29 : vector<1x4x1xf32>
    %c0_14 = arith.constant 0 : index
    %c0_15 = arith.constant 0 : index
    %c0_16 = arith.constant 0 : index
    %32 = vector.load %arg1[%c0_14, %c0_15, %c0_16] : memref<1x4x256xf32, #tpu.memory_space<vmem>>, vector<1x4x256xf32>
    %33 = vector.broadcast %31 : vector<1x4x1xf32> to vector<1x4x256xf32>
    %34 = arith.mulf %32, %33 : vector<1x4x256xf32>
    %c0_17 = arith.constant 0 : index
    %c0_18 = arith.constant 0 : index
    %c0_19 = arith.constant 0 : index
    %35 = vector.load %arg3[%c0_17, %c0_18, %c0_19] : memref<1x4x256xf32, #tpu.memory_space<vmem>>, vector<1x4x256xf32>
    tpu.vector_store %arg3[%c0_17, %c0_18, %c0_19], %34 {strides = array<i32>} : memref<1x4x256xf32, #tpu.memory_space<vmem>>, vector<1x4x256xf32>,
    return
  }
  func.func @transform_0(%arg0: i32) -> (i32, i32, i32) {
    %c0_i32 = arith.constant 0 : i32
    %c0_i32_0 = arith.constant 0 : i32
    %c0_i32_1 = arith.constant 0 : i32
    return %arg0, %c0_i32, %c0_i32_0 : i32, i32, i32
  }
  func.func @transform_1(%arg0: i32) -> (i32, i32, i32) {
    %c0_i32 = arith.constant 0 : i32
    %c0_i32_0 = arith.constant 0 : i32
    %c0_i32_1 = arith.constant 0 : i32
    %c0_i32_2 = arith.constant 0 : i32
    return %c0_i32, %c0_i32_0, %c0_i32_1 : i32, i32, i32
  }
  func.func @transform_2(%arg0: i32) -> (i32, i32, i32) {
    %c0_i32 = arith.constant 0 : i32
    %c0_i32_0 = arith.constant 0 : i32
    %c0_i32_1 = arith.constant 0 : i32
    return %arg0, %c0_i32, %c0_i32_0 : i32, i32, i32
  }
}

</mosaic_0001>

<llo_original>
// kernel: tpu_custom_call.1
$region0: #{tpu_custom_call.1}
  #allocation0 [shape = 'u32[]', space=smem, size = 0x4, offset = 0x4, fixed_abs, tag = 'smem constant byte address 0x4 - core index']
  #allocation1 [shape = 'u32[144,128]{1,0:T(1,128)}', space=vmem, size = 0x12000, scoped, tag = 'internal scratch']
  %s0 = inlined_call_operand.hbm [shape: f32[2,4,256], index: 0, kind: input, shape index: {}]
  %s1 = inlined_call_operand.vmem [shape: f32[3,4,1], index: 1, kind: input, shape index: {}]
  %s2 = inlined_call_operand.hbm [shape: f32[2,4,256], index: 2, kind: output, shape index: {}]
  %s3 = sld [smem:[#allocation0]]
  $region45: #{tpu_custom_call.1} parent=0
    _
  %s5 = ssub.s32 1, %s3
  %s6 = scalar_select 0, %s5, %s3
  $region1: #{tpu_custom_call.1} parent=0
    #allocation2 [shape = 'u8[8192]{0}', space=vmem, size = 0x2000, scoped, tag = 'input window, operand 0']
    #allocation3 [shape = 's32[2]{0}', space=sflag, size = 0x8, scoped, tag = 'scoped memory for tpu_custom_call.1']
    #allocation4 [shape = 's32[2]{0}', space=sflag, size = 0x8, scoped, tag = 'scoped memory for tpu_custom_call.1']
    #allocation5 [shape = 'u8[8192]{0}', space=vmem, size = 0x2000, scoped, tag = 'output window, operand 0']
    %7 = vsyncpa [#allocation3], 0
    %s8 = scalar_lea.sflag [#allocation3], 1
    %9 = vsyncpa %s8, 0
    %10 = vsyncpa [#allocation4], 0
    %s11 = scalar_lea.sflag [#allocation4], 1
    %12 = vsyncpa %s11, 0
    loop: start=0, step=1, limit=4
    $region2: #{tpu_custom_call.1} parent=1 // loop_pre_header
      _
    $region3: #{tpu_custom_call.1} parent=1 // loop_header
      %s14 = sphi 0, %s18
      %p15 = scmp.ge.s32.totalorder %s14, 4
      %s24 = sphi 0, %s26
      %s27 = sphi 0, %s24
      %s28 = sphi 0, %s27
      %s44 = sphi 0, %s28
      %s48 = sphi 0, %s48
      %s50 = sphi 0, %s48
      %s51 = sphi 0, %s50
      %s65 = sphi 0, %s51
      %s71 = sphi 0, %s73
      %s74 = sphi 0, %s71
      %s75 = sphi 0, %s74
      %s91 = sphi 0, %s75
    $region4: #{tpu_custom_call.1} parent=1 // loop_header_branch
      %17 = sbr.rel (%p15) target = $region8
    $region5: #{tpu_custom_call.1} parent=1 // loop_body
      %s19 = ssub.s32 %s14, 1
      %s20 = ssub.s32 %s14, 2
      %s21 = sadd.s32 %s14, 1
      %s22 = ssub.s32 %s14, %s21
      %p23 = scmp.eq.s32.totalorder %s22, 0
      %s25 = sadd.s32 %s24, 1
      %s26 = scalar_select %p23, %s24, %s25
      %p29 = pneg %p23
      %p30 = scmp.eq.s32.totalorder %s14, 1
      %p31 = por %p29, %p30
      %p32 = scmp.ne.s32.totalorder %s24, %s27
      %p33 = scmp.eq.s32.totalorder %s14, 0
      %p34 = por %p32, %p33
      %p35 = scmp.ne.s32.totalorder %s24, %s27
      %p36 = scmp.eq.s32.totalorder %s19, 1
      %p37 = por %p35, %p36
      %p38 = scmp.ne.s32.totalorder %s27, %s28
      %p39 = scmp.eq.s32.totalorder %s19, 0
      %p40 = por %p38, %p39
      %p41 = scmp.ne.s32.totalorder %s27, %s28
      %p42 = scmp.eq.s32.totalorder %s20, 1
      %p43 = por %p41, %p42
      %p45 = scmp.ne.s32.totalorder %s28, %s44
      %p46 = scmp.eq.s32.totalorder %s20, 0
      %p47 = por %p45, %p46
      %s49 = sadd.s32 %s48, 1
      %p52 = scmp.eq.s32.totalorder %s14, 1
      %p53 = scmp.ne.s32.totalorder %s48, %s50
      %p54 = scmp.eq.s32.totalorder %s14, 0
      %p55 = por %p53, %p54
      %p56 = scmp.ne.s32.totalorder %s48, %s50
      %p57 = scmp.eq.s32.totalorder %s19, 1
      %p58 = por %p56, %p57
      %p59 = scmp.ne.s32.totalorder %s50, %s51
      %p60 = scmp.eq.s32.totalorder %s19, 0
      %p61 = por %p59, %p60
      %p62 = scmp.ne.s32.totalorder %s50, %s51
      %p63 = scmp.eq.s32.totalorder %s20, 1
      %p64 = por %p62, %p63
      %p66 = scmp.ne.s32.totalorder %s51, %s65
      %p67 = scmp.eq.s32.totalorder %s20, 0
      %p68 = por %p66, %p67
      %s69 = ssub.s32 %s14, %s21
      %p70 = scmp.eq.s32.totalorder %s69, 0
      %s72 = sadd.s32 %s71, 1
      %s73 = scalar_select %p70, %s71, %s72
      %p76 = pneg %p70
      %p77 = scmp.eq.s32.totalorder %s14, 1
      %p78 = por %p76, %p77
      %p79 = scmp.ne.s32.totalorder %s71, %s74
      %p80 = scmp.eq.s32.totalorder %s14, 0
      %p81 = por %p79, %p80
      %p82 = scmp.ne.s32.totalorder %s71, %s74
      %p83 = scmp.eq.s32.totalorder %s19, 1
      %p84 = por %p82, %p83
      %p85 = scmp.ne.s32.totalorder %s74, %s75
      %p86 = scmp.eq.s32.totalorder %s19, 0
      %p87 = por %p85, %p86
      %p88 = scmp.ne.s32.totalorder %s74, %s75
      %p89 = scmp.eq.s32.totalorder %s20, 1
      %p90 = por %p88, %p89
      %p92 = scmp.ne.s32.totalorder %s75, %s91
      %p93 = scmp.eq.s32.totalorder %s20, 0
      %p94 = por %p92, %p93
      %p95 = scmp.le.s32.totalorder 1, %s14
      %p96 = scmp.lt.s32.totalorder %s14, 3
      %p97 = pnand %p95, %p96
      %p98 = pneg %p97
      // Predicated region
      $region9: #{tpu_custom_call.1} parent=5 // pred_check
        _
      $region10: #{tpu_custom_call.1} parent=5 // pred_check_branch
        %100 = sbr.rel (%p97) target = $region12
      $region11: #{tpu_custom_call.1} parent=5 // pred_region
        %s101 = ssub.s32 %s14, 1
        // Predicated region
        $region13: #{tpu_custom_call.1} parent=11 // pred_check
          %p102 = pneg %p61
        $region14: #{tpu_custom_call.1} parent=11 // pred_check_branch
          %104 = sbr.rel (%p102) target = $region16
        $region15: #{tpu_custom_call.1} parent=11 // pred_region
          _
        $region16: #{tpu_custom_call.1} parent=11 // pred_fallthru
          _
      $region12: #{tpu_custom_call.1} parent=5 // pred_fallthru
        _
      %p105 = scmp.lt.s32.totalorder %s14, 2
      // Predicated region
      $region17: #{tpu_custom_call.1} parent=5 // pred_check
        %p106 = pneg %p105
      $region18: #{tpu_custom_call.1} parent=5 // pred_check_branch
        %108 = sbr.rel (%p106) target = $region20
      $region19: #{tpu_custom_call.1} parent=5 // pred_region
        // Predicated region
        $region21: #{tpu_custom_call.1} parent=19 // pred_check
          %p109 = pneg %p34
        $region22: #{tpu_custom_call.1} parent=19 // pred_check_branch
          %111 = sbr.rel (%p109) target = $region24
        $region23: #{tpu_custom_call.1} parent=19 // pred_region
          %s112 = sand.u32 %s24, 1
          %s113 = scalar_lea.sflag [#allocation3], %s112
          %s114 = sand.u32 %s24, 1
          %s115 = smul.addr %s114, 8
          %s116 = scalar_lea.vmem [#allocation2], %s115
          %s118 = ssub.s32 128, 128
          %119 = vsyncadd %s113, %s118
          %s120 = smul.addr %s14, 2
          %s121 = smul.addr %s120, 64
          %s122 = scalar_lea.hbm %s0, %s121
          %s124 = sshll.u32 %s116, 4
          %s125 = int_to_ptr.vmem [resolvable:$true] %s124
          %127 = dma.hbm_to_vmem [thread:$0]  %s122, 128, %s125, %s113
        $region24: #{tpu_custom_call.1} parent=19 // pred_fallthru
          _
      $region20: #{tpu_custom_call.1} parent=5 // pred_fallthru
        _
      %p128 = scmp.le.s32.totalorder 1, %s14
      %p129 = scmp.lt.s32.totalorder %s14, 3
      %p130 = pnand %p128, %p129
      %p131 = pneg %p130
      // Predicated region
      $region25: #{tpu_custom_call.1} parent=5 // pred_check
        _
      $region26: #{tpu_custom_call.1} parent=5 // pred_check_branch
        %133 = sbr.rel (%p130) target = $region28
      $region27: #{tpu_custom_call.1} parent=5 // pred_region
        %s134 = ssub.s32 %s14, 1
        %s135 = sand.u32 %s27, 1
        %s136 = scalar_lea.sflag [#allocation3], %s135
        %s137 = sand.u32 %s27, 1
        %s138 = smul.addr %s137, 8
        %s139 = scalar_lea.vmem [#allocation2], %s138
        // Predicated region
        $region29: #{tpu_custom_call.1} parent=27 // pred_check
          %p140 = pneg %p40
        $region30: #{tpu_custom_call.1} parent=27 // pred_check_branch
          %142 = sbr.rel (%p140) target = $region32
        $region31: #{tpu_custom_call.1} parent=27 // pred_region
          %143 = dma.done %s136, 128
        $region32: #{tpu_custom_call.1} parent=27 // pred_fallthru
          _
        %s144 = sand.u32 %s27, 1
        %s145 = scalar_lea.sflag [#allocation3], %s144
        %s146 = sand.u32 %s27, 1
        %s147 = smul.addr %s146, 8
        %s148 = scalar_lea.vmem [#allocation2], %s147
        %p149 = pneg %p40
        %p150 = pneg %p37
        %p151 = pneg %p61
        %p152 = pneg %p58
        %p153 = pneg %p87
        %p154 = pneg %p84
        %s155 = sand.u32 %s74, 1
        %s156 = scalar_lea.sflag [#allocation4], %s155
        %s157 = sand.u32 %s74, 1
        %s158 = smul.addr %s157, 8
        %s159 = scalar_lea.vmem [#allocation5], %s158
        %v160 = vld [vmem:[%s1] sm:$0xf]
        %s161 = scalar_lea.vmem %s1, 4
        %v162 = vld [vmem:[%s161] sm:$0xf]
        %s163 = scalar_lea.vmem %s1, 8
        %v164 = vld [vmem:[%s163] sm:$0xf]
        %v165 = vld [vmem:[%s139] sm:$0xff]
        %v166 = vmul.f32 %v165, %v165
        %v168 = vcombine.high %v166, %v166
        %vm170 = vcmask 1043456
        %v171 = vsel %vm170, %v166, 0.0
        %v172 = vsel %vm170, %v168, 0.0
        %v173 = vadd.f32 %v171, %v172
        %174 = vadd.xlane.f32.xlu0 %v173
        %v175 = vpop.xlane.xlu0 %174
        %v176 = vadd.f32 %v175, 1e-05
        %v177 = vrsqrt.pop %v176
        %v178 = vmul.f32 %v176, %v177
        %vm179 = vcmp.eq.f32.partialorder %v176, inf
        %v180 = vsel %vm179, %v176, %v178
        %vm181 = vcmp.eq.f32.partialorder %v176, 0.0
        %v182 = vand.u32 %v176, 2147483648
        %v183 = vsel %vm181, %v182, %v180
        %v184 = vmul.f32 %v183, %v160
        %v185 = vmul.f32 %v184, %v184
        %vm186 = vcmask 3072
        %v187 = vsel %vm186, %v185, 0.0
        %v188 = vrot.slane %v187, 4
        %v189 = vadd.f32 %v187, %v188
        %v190 = vrot.slane %v189, 2
        %v191 = vadd.f32 %v189, %v190
        %v192 = vrot.slane %v191, 1
        %v193 = vadd.f32 %v191, %v192
        %v194 = vrcp.pop 4.0
        %v195 = vmul.f32 %v193, %v194
        %v196 = vadd.f32 %v195, 1e-05
        %v197 = vrsqrt.pop %v196
        %v198 = vmul.f32 %v162, %v197
        %v199 = vmul.f32 %v184, %v198
        %v200 = vadd.f32 %v199, %v164
        %v201 = vtanh.pop %v200
        %v202 = vadd.f32 %v201, 1.0
        %204 = vset.pattern.permute.xlu0 0
        %205 = vperm.xlu0 %204, %v202
        %v206 = vpop.permute.xlu0 %205
        %v208 = vunpack.c.l.s4 839922192
        %v209 = vunpack.c.0.s8 %v208
        %v210 = vlaneseq
        %v211 = vshrl.u32 %v210, 7
        %v212 = vsub.s32 %v209, %v211
        %v213 = vrot.slane %v206, %v212
        %v215 = vmul.f32 %v165, %v213
        %216 = vst [vmem:[%s159] sm:$0xff] %v215
        %s217 = sand.u32 %s74, 1
        %s218 = scalar_lea.sflag [#allocation4], %s217
        %s219 = sand.u32 %s74, 1
        %s220 = smul.addr %s219, 8
        %s221 = scalar_lea.vmem [#allocation5], %s220
        // Predicated region
        $region33: #{tpu_custom_call.1} parent=27 // pred_check
          %p222 = pneg %p84
        $region34: #{tpu_custom_call.1} parent=27 // pred_check_branch
          %224 = sbr.rel (%p222) target = $region36
        $region35: #{tpu_custom_call.1} parent=27 // pred_region
          %s226 = ssub.s32 128, 128
          %227 = vsyncadd %s218, %s226
          %s228 = smul.addr %s19, 2
          %s229 = smul.addr %s228, 64
          %s230 = scalar_lea.hbm %s2, %s229
          %s232 = sshll.u32 %s221, 4
          %s233 = int_to_ptr.vmem [resolvable:$true] %s232
          %235 = dma.vmem_to_hbm [thread:$0]  %s233, 128, %s230, %s218
        $region36: #{tpu_custom_call.1} parent=27 // pred_fallthru
          _
      $region28: #{tpu_custom_call.1} parent=5 // pred_fallthru
        _
      %p236 = scmp.le.s32.totalorder 2, %s14
      // Predicated region
      $region37: #{tpu_custom_call.1} parent=5 // pred_check
        %p237 = pneg %p236
      $region38: #{tpu_custom_call.1} parent=5 // pred_check_branch
        %239 = sbr.rel (%p237) target = $region40
      $region39: #{tpu_custom_call.1} parent=5 // pred_region
        %s240 = ssub.s32 %s14, 2
        // Predicated region
        $region41: #{tpu_custom_call.1} parent=39 // pred_check
          %p241 = pneg %p90
        $region42: #{tpu_custom_call.1} parent=39 // pred_check_branch
          %243 = sbr.rel (%p241) target = $region44
        $region43: #{tpu_custom_call.1} parent=39 // pred_region
          %s244 = sand.u32 %s75, 1
          %s245 = scalar_lea.sflag [#allocation4], %s244
          %s246 = sand.u32 %s75, 1
          %s247 = smul.addr %s246, 8
          %s248 = scalar_lea.vmem [#allocation5], %s247
          %249 = dma.done %s245, 128
        $region44: #{tpu_custom_call.1} parent=39 // pred_fallthru
          _
      $region40: #{tpu_custom_call.1} parent=5 // pred_fallthru
        _
    $region6: #{tpu_custom_call.1} parent=1 // loop_footer
      %s18 = sadd.s32 1, %s14
    $region7: #{tpu_custom_call.1} parent=1 // loop_footer_branch
      %13 = sbr.rel target = $region3
    $region8: #{tpu_custom_call.1} parent=1 // loop_exit
      _
    %250 = vsyncpa [#allocation3], 1
    %s251 = scalar_lea.sflag [#allocation3], 1
    %252 = vsyncpa %s251, 1
    %253 = vsyncpa [#allocation4], 1
    %s254 = scalar_lea.sflag [#allocation4], 1
    %255 = vsyncpa %s254, 1

</llo_original>
